<compile_context>
chip_gen: v7x
topology: tpu7x:2x2x1
jax: 0.10.0
libtpu: 0.0.40
codegen_flags: <defaults>
</compile_context>

<pallas_src>
import math

import jax
import jax.numpy as jnp
from jax.experimental import pallas as pl
from jax.experimental.pallas import tpu as pltpu


def _normalize_kernel(x_ref, p_ref, o_ref):
    # x_ref : (TR, TC) tile; rows = packed (n, c[, k]), cols = flattened pixels
    # p_ref : (TR, 2) per-row params: [:, 0] = mean, [:, 1] = 1/std
    p = p_ref[...]
    o_ref[...] = (x_ref[...] - p[:, 0:1]) * p[:, 1:2]


def _round_up(x, m):
    return -(-x // m) * m


def _pack_shape(n, c, h, w):
    """Choose the packed 2-D layout (rows, cols) with cols % 128 == 0.

    Returns (rows, cols, cols_padded, fold): the lane-padded image reshapes as
      (N*C, cols_padded) -> (N*C*fold, cols_padded // fold) = (rows, cols).
    """
    rows0 = n * c
    cols0 = h * w
    need = 8 // math.gcd(rows0, 8)        # fold factor making rows % 8 == 0
    p1 = _round_up(cols0, 128)            # minimal lane padding (always applied)
    if need == 1:
        return rows0, p1, p1, 1
    pf = _round_up(cols0, 128 * need)     # padding required by the full fold
    if (pf - p1) * 8 <= cols0:            # <= ~12.5% extra padding: fold fully
        fold, cols_p = need, pf
    else:                                 # tiny image: partial fold, no extra pad
        fold, cols_p = math.gcd(need, p1 // 128), p1
    return rows0 * fold, cols_p // fold, cols_p, fold


def _choose_tiles(rows, cols, itemsize, max_block_bytes=2 * 1024 * 1024):
    """Pick (row_tile, col_tile).  `cols` is a multiple of 128 (caller)."""
    budget = max(8 * 128, max_block_bytes // itemsize)   # elements per block
    if rows % 8 == 0 or rows * 128 > budget:
        # Sublane-aligned row tiles; a ragged final row-block (only reachable
        # for degenerate shapes) is masked by Pallas.
        tc = min(cols, max(128, (budget // 8) // 128 * 128))
        tr = min(_round_up(rows, 8), max(8, (budget // tc) // 8 * 8))
    else:
        # Small ragged row count: take the full row extent in one block.
        tr = rows
        tc = min(cols, max(128, (budget // rows) // 128 * 128))
    return tr, tc


def normalization_forward(img, mean, std):
    """img: (N, C, H, W); mean/std: (C,).  Returns (img - mean)/std (NCHW)."""
    N, C, H, W = img.shape
    dtype = img.dtype
    rows0, cols0 = N * C, H * W
    rows, cols, cols_p, fold = _pack_shape(N, C, H, W)

    x = img.reshape(rows0, cols0)
    if cols_p != cols0:
        x = jnp.pad(x, ((0, 0), (0, cols_p - cols0)))
    x = x.reshape(rows, cols)

    # Per-row params: packed row r corresponds to channel (r // fold) % C.
    mean_r = jnp.repeat(jnp.tile(mean.astype(dtype), N), fold)           # (rows,)
    inv_std_r = jnp.repeat(jnp.tile((1.0 / std).astype(dtype), N), fold)  # (rows,)
    params = jnp.stack([mean_r, inv_std_r], axis=-1)                      # (rows, 2)

    tr, tc = _choose_tiles(rows, cols, jnp.dtype(dtype).itemsize)
    grid = (pl.cdiv(rows, tr), pl.cdiv(cols, tc))

    out = pl.pallas_call(
        _normalize_kernel,
        out_shape=jax.ShapeDtypeStruct((rows, cols), dtype),
        grid_spec=pltpu.PrefetchScalarGridSpec(
            num_scalar_prefetch=0,
            grid=grid,
            in_specs=[
                pl.BlockSpec((tr, tc), lambda i, j: (i, j)),
                pl.BlockSpec((tr, 2), lambda i, j: (i, 0)),
            ],
            out_specs=pl.BlockSpec((tr, tc), lambda i, j: (i, j)),
        ),
        compiler_params=pltpu.CompilerParams(
            dimension_semantics=("parallel", "parallel"),
        ),
    )(x, params)

    out = out.reshape(rows0, cols_p)
    if cols_p != cols0:
        out = out[:, :cols0]
    return out.reshape(N, C, H, W)


if __name__ == "__main__":
    # ImageNet/VGG normalization constants (the module's canonical use).
    mean = jnp.array([0.485, 0.456, 0.406], dtype=jnp.float32)
    std = jnp.array([0.229, 0.224, 0.225], dtype=jnp.float32)

    # Primary run: small NCHW batch.  N*C = 6 -> folded to dense (24, 256).
    key = jax.random.PRNGKey(0)
    img = jax.random.uniform(key, (2, 3, 32, 32), dtype=jnp.float32)
    out = jax.block_until_ready(normalization_forward(img, mean, std))

    ref = (img - mean.reshape(-1, 1, 1)) / std.reshape(-1, 1, 1)
    assert out.shape == img.shape
    assert jnp.allclose(out, ref, atol=1e-6, rtol=1e-6)

    # Secondary check: H*W not a multiple of 128 (exercises the column-padding
    # + partial-fold path).
    img2 = jax.random.uniform(jax.random.PRNGKey(0), (1, 3, 17, 19), dtype=jnp.float32)
    out2 = jax.block_until_ready(normalization_forward(img2, mean, std))
    ref2 = (img2 - mean.reshape(-1, 1, 1)) / std.reshape(-1, 1, 1)
    assert jnp.allclose(out2, ref2, atol=1e-6, rtol=1e-6)

    print("KERNEL_OK")
</pallas_src>

<mosaic_0001>
module attributes {stable_mosaic.version = 11 : i64} {
  func.func @_normalize_kernel(%arg0: i32, %arg1: i32, %arg2: memref<24x256xf32, #tpu.memory_space<vmem>>, %arg3: memref<24x2xf32, #tpu.memory_space<vmem>>, %arg4: memref<24x256xf32, #tpu.memory_space<vmem>>) attributes {dimension_semantics = [#tpu.dimension_semantics<parallel>, #tpu.dimension_semantics<parallel>], iteration_bounds = array<i64: 1, 1>, scalar_prefetch = 0 : i64, scratch_operands = 0 : i64, tpu.core_type = #tpu.core_type<tc>, window_params = [{transform_indices = @transform_0, window_bounds = array<i64: 24, 256>}, {transform_indices = @transform_1, window_bounds = array<i64: 24, 2>}, {transform_indices = @transform_2, window_bounds = array<i64: 24, 256>}]} {
    %c0 = arith.constant 0 : index
    %c0_0 = arith.constant 0 : index
    %0 = vector.load %arg3[%c0, %c0_0] : memref<24x2xf32, #tpu.memory_space<vmem>>, vector<24x2xf32>
    %c0_1 = arith.constant 0 : index
    %c0_2 = arith.constant 0 : index
    %1 = vector.load %arg2[%c0_1, %c0_2] : memref<24x256xf32, #tpu.memory_space<vmem>>, vector<24x256xf32>
    %2 = vector.extract_strided_slice %0 {offsets = [0, 0], sizes = [24, 1], strides = [1, 1]} : vector<24x2xf32> to vector<24x1xf32>
    %3 = vector.broadcast %2 : vector<24x1xf32> to vector<24x256xf32>
    %4 = arith.subf %1, %3 : vector<24x256xf32>
    %5 = vector.extract_strided_slice %0 {offsets = [0, 1], sizes = [24, 1], strides = [1, 1]} : vector<24x2xf32> to vector<24x1xf32>
    %6 = vector.broadcast %5 : vector<24x1xf32> to vector<24x256xf32>
    %7 = arith.mulf %4, %6 : vector<24x256xf32>
    %c0_3 = arith.constant 0 : index
    %c0_4 = arith.constant 0 : index
    %8 = vector.load %arg4[%c0_3, %c0_4] : memref<24x256xf32, #tpu.memory_space<vmem>>, vector<24x256xf32>
    tpu.vector_store %arg4[%c0_3, %c0_4], %7 {strides = array<i32>} : memref<24x256xf32, #tpu.memory_space<vmem>>, vector<24x256xf32>,
    return
  }
  func.func @transform_0(%arg0: i32, %arg1: i32) -> (i32, i32) {
    %c0_i32 = arith.constant 0 : i32
    return %arg0, %arg1 : i32, i32
  }
  func.func @transform_1(%arg0: i32, %arg1: i32) -> (i32, i32) {
    %c0_i32 = arith.constant 0 : i32
    %c0_i32_0 = arith.constant 0 : i32
    return %arg0, %c0_i32 : i32, i32
  }
  func.func @transform_2(%arg0: i32, %arg1: i32) -> (i32, i32) {
    %c0_i32 = arith.constant 0 : i32
    return %arg0, %arg1 : i32, i32
  }
}

</mosaic_0001>

<llo_original>
// kernel: tpu_custom_call.1
$region0: #{tpu_custom_call.1}
  #allocation0 [shape = 'u32[]', space=smem, size = 0x4, offset = 0x4, fixed_abs, tag = 'smem constant byte address 0x4 - core index']
  #allocation1 [shape = 'u32[144,128]{1,0:T(1,128)}', space=vmem, size = 0x12000, scoped, tag = 'internal scratch']
  %s0 = inlined_call_operand.hbm [shape: f32[24,256], index: 0, kind: input, shape index: {}]
  %s1 = inlined_call_operand.vmem [shape: f32[24,2], index: 1, kind: input, shape index: {}]
  %s2 = inlined_call_operand.hbm [shape: f32[24,256], index: 2, kind: output, shape index: {}]
  %s3 = sld [smem:[#allocation0]]
  $region22: #{tpu_custom_call.1} parent=0
    _
  %s5 = ssub.s32 1, %s3
  %s6 = scalar_select 0, %s5, %s3
  $region1: #{tpu_custom_call.1} parent=0
    #allocation2 [shape = 'u8[24576]{0}', space=vmem, size = 0x6000, scoped, tag = 'input window, operand 0, single buffered']
    #allocation3 [shape = 's32[1]{0}', space=sflag, size = 0x4, scoped, tag = 'scoped memory for tpu_custom_call.1']
    #allocation4 [shape = 's32[1]{0}', space=sflag, size = 0x4, scoped, tag = 'scoped memory for tpu_custom_call.1']
    #allocation5 [shape = 'u8[24576]{0}', space=vmem, size = 0x6000, scoped, tag = 'output window, operand 0, single buffered']
    %7 = vsyncpa [#allocation3], 0
    %8 = vsyncpa [#allocation4], 0
    // Predicated region
    $region2: #{tpu_custom_call.1} parent=1 // pred_check
      _
    $region3: #{tpu_custom_call.1} parent=1 // pred_check_branch
      %10 = sbr.rel (0) target = $region5
    $region4: #{tpu_custom_call.1} parent=1 // pred_region
      %s12 = ssub.s32 768, 768
      %13 = vsyncadd [#allocation3], %s12
      %s14 = sshll.u32 [#allocation2], 4
      %s15 = int_to_ptr.vmem [resolvable:$true] %s14
      %20 = dma.hbm_to_vmem [thread:$0]  %s0, 768, %s15, [#allocation3], 256, 256, 16
    $region5: #{tpu_custom_call.1} parent=1 // pred_fallthru
      _
    // Predicated region
    $region6: #{tpu_custom_call.1} parent=1 // pred_check
      _
    $region7: #{tpu_custom_call.1} parent=1 // pred_check_branch
      %22 = sbr.rel (0) target = $region9
    $region8: #{tpu_custom_call.1} parent=1 // pred_region
      _
    $region9: #{tpu_custom_call.1} parent=1 // pred_fallthru
      _
    // Predicated region
    $region10: #{tpu_custom_call.1} parent=1 // pred_check
      _
    $region11: #{tpu_custom_call.1} parent=1 // pred_check_branch
      %24 = sbr.rel (0) target = $region13
    $region12: #{tpu_custom_call.1} parent=1 // pred_region
      %25 = dma.done [#allocation3], 768
    $region13: #{tpu_custom_call.1} parent=1 // pred_fallthru
      _
    %v26 = vld [vmem:[%s1] sm:$0xff]
    %v27 = vld [vmem:[%s1 + $0x8] sm:$0xff]
    %v28 = vld [vmem:[%s1 + $0x10] sm:$0xff]
    %v29 = vld [vmem:[#allocation2] sm:$0xff]
    %v30 = vld [vmem:[#allocation2 + $0x8] sm:$0xff]
    %v31 = vld [vmem:[#allocation2 + $0x10] sm:$0xff]
    %v32 = vld [vmem:[#allocation2 + $0x18] sm:$0xff]
    %v33 = vld [vmem:[#allocation2 + $0x20] sm:$0xff]
    %v34 = vld [vmem:[#allocation2 + $0x28] sm:$0xff]
    %36 = vset.pattern.permute.xlu0 0
    %37 = vperm.xlu0 %36, %v26
    %v38 = vpop.permute.xlu0 %37
    %41 = vset.pattern.permute.xlu0 0
    %42 = vperm.xlu0 %41, %v27
    %v43 = vpop.permute.xlu0 %42
    %46 = vset.pattern.permute.xlu0 0
    %47 = vperm.xlu0 %46, %v28
    %v48 = vpop.permute.xlu0 %47
    %v50 = vsub.f32 %v29, %v38
    %v51 = vsub.f32 %v30, %v38
    %v52 = vsub.f32 %v31, %v43
    %v53 = vsub.f32 %v32, %v43
    %v54 = vsub.f32 %v33, %v48
    %v55 = vsub.f32 %v34, %v48
    %56 = vset.pattern.permute.xlu0 1
    %57 = vperm.xlu0 %56, %v26
    %v58 = vpop.permute.xlu0 %57
    %60 = vset.pattern.permute.xlu0 1
    %61 = vperm.xlu0 %60, %v27
    %v62 = vpop.permute.xlu0 %61
    %64 = vset.pattern.permute.xlu0 1
    %65 = vperm.xlu0 %64, %v28
    %v66 = vpop.permute.xlu0 %65
    %v68 = vmul.f32 %v50, %v58
    %v69 = vmul.f32 %v51, %v58
    %v70 = vmul.f32 %v52, %v62
    %v71 = vmul.f32 %v53, %v62
    %v72 = vmul.f32 %v54, %v66
    %v73 = vmul.f32 %v55, %v66
    %74 = vst [vmem:[#allocation5] sm:$0xff] %v68
    %75 = vst [vmem:[#allocation5 + $0x8] sm:$0xff] %v69
    %76 = vst [vmem:[#allocation5 + $0x10] sm:$0xff] %v70
    %77 = vst [vmem:[#allocation5 + $0x18] sm:$0xff] %v71
    %78 = vst [vmem:[#allocation5 + $0x20] sm:$0xff] %v72
    %79 = vst [vmem:[#allocation5 + $0x28] sm:$0xff] %v73
    // Predicated region
    $region14: #{tpu_custom_call.1} parent=1 // pred_check
      _
    $region15: #{tpu_custom_call.1} parent=1 // pred_check_branch
      %81 = sbr.rel (0) target = $region17
    $region16: #{tpu_custom_call.1} parent=1 // pred_region
      %s83 = ssub.s32 768, 768
      %84 = vsyncadd [#allocation4], %s83
      %s85 = sshll.u32 [#allocation5], 4
      %s86 = int_to_ptr.vmem [resolvable:$true] %s85
      %91 = dma.vmem_to_hbm [thread:$0]  %s86, 768, %s2, [#allocation4], 256, 256, 16
    $region17: #{tpu_custom_call.1} parent=1 // pred_fallthru
      _
    // Predicated region
    $region18: #{tpu_custom_call.1} parent=1 // pred_check
      _
    $region19: #{tpu_custom_call.1} parent=1 // pred_check_branch
      %93 = sbr.rel (0) target = $region21
    $region20: #{tpu_custom_call.1} parent=1 // pred_region
      %94 = dma.done [#allocation4], 768
    $region21: #{tpu_custom_call.1} parent=1 // pred_fallthru
      _
    %95 = vsyncpa [#allocation3], 1
    %96 = vsyncpa [#allocation4], 1

</llo_original>
